<compile_context>
chip_gen: v7x
topology: tpu7x:2x2x1
jax: 0.10.0
libtpu: 0.0.40
codegen_flags: <defaults>
</compile_context>

<pallas_src>
import functools

import jax
import jax.numpy as jnp
from jax.experimental import pallas as pl
from jax.experimental.pallas import tpu as pltpu


# ----------------------------- Pallas kernels ------------------------------


def patch_embed_kernel(xp_ref, w_ref, b_ref, pos_ref, out_ref):
    """Patch projection (stride==kernel conv as a matmul) + pos-embed add.

    xp_ref : (1, N, P) bf16  flattened patches for one batch element
    w_ref  : (P, C)    bf16  conv weight reshaped/transposed to (Cin*p*p, C)
    b_ref  : (1, C)    f32   conv bias
    pos_ref: (N, C)    f32   positional embedding
    out_ref: (1, N, C) bf16
    """
    x = xp_ref[0]                                                  # (N, P) bf16
    y = jnp.dot(x, w_ref[...], preferred_element_type=jnp.float32)  # f32 acc
    y = y + b_ref[...] + pos_ref[...]
    out_ref[0] = y.astype(out_ref.dtype)


def fused_blocks_kernel(x_ref,
                        ln1w_ref, ln1b_ref,
                        wq_ref, wk_ref, wv_ref,
                        bq_ref, bk_ref, bv_ref,
                        wproj_ref, bproj_ref,
                        ln2w_ref, ln2b_ref,
                        wfc1_ref, bfc1_ref,
                        wfc2_ref, bfc2_ref,
                        out_ref, *, num_heads):
    """All transformer blocks, fused.  grid = (B, depth), depth innermost.

    x_ref   : (1, N, C) bf16            tokens (DMA'd once per batch element)
    ln*/b*  : (1, 1, C) / (1, 1, hidden) f32   (current layer's slice)
    w*      : (1, C, C) / (1, C, hidden) / (1, hidden, C) bf16
    out_ref : (1, N, C) f32             VMEM-resident carry across the depth axis
    """
    l = pl.program_id(1)

    # Initialize the resident f32 carry from the bf16 input at layer 0.
    @pl.when(l == 0)
    def _():
        out_ref[0] = x_ref[0].astype(jnp.float32)

    x = out_ref[0]                                                 # (N, C) f32
    N, C = x.shape
    dh = C // num_heads
    scale = float(dh) ** -0.5

    def layernorm(v, w, b):
        mu = jnp.mean(v, axis=-1, keepdims=True)
        d = v - mu
        var = jnp.mean(d * d, axis=-1, keepdims=True)
        return d * jax.lax.rsqrt(var + 1e-5) * w + b

    # --- attention branch (pre-norm) ---------------------------------------
    h = layernorm(x, ln1w_ref[0], ln1b_ref[0]).astype(jnp.bfloat16)
    q = jnp.dot(h, wq_ref[0], preferred_element_type=jnp.float32) + bq_ref[0]
    k = jnp.dot(h, wk_ref[0], preferred_element_type=jnp.float32) + bk_ref[0]
    v = jnp.dot(h, wv_ref[0], preferred_element_type=jnp.float32) + bv_ref[0]

    wproj = wproj_ref[0]                                           # (C, C) bf16
    acc = jnp.zeros((N, C), jnp.float32)
    for hd in range(num_heads):
        lo = hd * dh
        qh = q[:, lo:lo + dh].astype(jnp.bfloat16)                 # (N, dh)
        kh = k[:, lo:lo + dh].astype(jnp.bfloat16)
        vh = v[:, lo:lo + dh].astype(jnp.bfloat16)
        # scores = q @ k^T  (contract last dims, no explicit transpose)
        s = jax.lax.dot_general(qh, kh, (((1,), (1,)), ((), ())),
                                preferred_element_type=jnp.float32) * scale
        s = s - jnp.max(s, axis=-1, keepdims=True)
        p = jnp.exp(s)
        p = p * pl.reciprocal(jnp.sum(p, axis=-1, keepdims=True), approx=True)
        oh = jnp.dot(p.astype(jnp.bfloat16), vh,
                     preferred_element_type=jnp.float32)           # (N, dh)
        # Fold the output projection per head: no concatenate, full C-wide output.
        acc = acc + jnp.dot(oh.astype(jnp.bfloat16), wproj[lo:lo + dh, :],
                            preferred_element_type=jnp.float32)
    x = x + acc + bproj_ref[0]

    # --- MLP branch (pre-norm) ----------------------------------------------
    h2 = layernorm(x, ln2w_ref[0], ln2b_ref[0]).astype(jnp.bfloat16)
    h2 = jnp.dot(h2, wfc1_ref[0], preferred_element_type=jnp.float32) + bfc1_ref[0]
    # TODO(synk): PyTorch nn.GELU uses exact erf GELU; tanh approximation used
    # here for guaranteed Mosaic lowering (EUP tanh).
    h2 = jax.nn.gelu(h2, approximate=True)
    h2 = jnp.dot(h2.astype(jnp.bfloat16), wfc2_ref[0],
                 preferred_element_type=jnp.float32) + bfc2_ref[0]
    x = x + h2

    out_ref[0] = x                                                 # carry / result


# ----------------------------- wrappers -------------------------------------

_VMEM_LIMIT = 48 * 1024 * 1024  # explicit scoped-VMEM limit (< v7x 64 MiB physical)


def patch_embed(xp, w, b, pos):
    B, N, P = xp.shape
    C = w.shape[1]
    return pl.pallas_call(
        patch_embed_kernel,
        out_shape=jax.ShapeDtypeStruct((B, N, C), jnp.bfloat16),
        grid=(B,),
        in_specs=[
            pl.BlockSpec((1, N, P), lambda i: (i, 0, 0)),
            pl.BlockSpec((P, C), lambda i: (0, 0)),
            pl.BlockSpec((1, C), lambda i: (0, 0)),
            pl.BlockSpec((N, C), lambda i: (0, 0)),
        ],
        out_specs=pl.BlockSpec((1, N, C), lambda i: (i, 0, 0)),
        compiler_params=pltpu.CompilerParams(
            dimension_semantics=("parallel",),
            vmem_limit_bytes=_VMEM_LIMIT),
    )(xp, w, b, pos)


_LAYER_ARG_ORDER = ["ln1w", "ln1b", "wq", "wk", "wv", "bq", "bk", "bv",
                    "wproj", "bproj", "ln2w", "ln2b",
                    "wfc1", "bfc1", "wfc2", "bfc2"]


def fused_blocks(x, layer_params, num_heads):
    """x: (B, N, C) bf16; layer_params: dict of (depth, ...) stacked arrays."""
    B, N, C = x.shape
    depth = layer_params["wq"].shape[0]
    kernel = functools.partial(fused_blocks_kernel, num_heads=num_heads)

    def wspec(a):  # per-layer weight: new block each step of the depth axis
        return pl.BlockSpec((1,) + a.shape[1:], lambda b, l: (l, 0, 0))

    weight_args = [layer_params[name] for name in _LAYER_ARG_ORDER]
    in_specs = ([pl.BlockSpec((1, N, C), lambda b, l: (b, 0, 0))]
                + [wspec(a) for a in weight_args])

    return pl.pallas_call(
        kernel,
        out_shape=jax.ShapeDtypeStruct((B, N, C), jnp.float32),
        grid=(B, depth),
        in_specs=in_specs,
        # Same output block across the depth axis -> x stays VMEM-resident
        # across all layers; HBM writeback only when the batch index changes.
        out_specs=pl.BlockSpec((1, N, C), lambda b, l: (b, 0, 0)),
        compiler_params=pltpu.CompilerParams(
            dimension_semantics=("parallel", "arbitrary"),
            vmem_limit_bytes=_VMEM_LIMIT),
    )(x, *weight_args)


def extract_patches(images, p):
    """NCHW images -> (B, N, Cin*p*p) flattened patches (glue, no compute)."""
    B, Cin, H, W = images.shape
    hw = H // p
    x = images.reshape(B, Cin, hw, p, hw, p)
    x = x.transpose(0, 2, 4, 1, 3, 5)          # (B, hw, hw, Cin, p, p)
    return x.reshape(B, hw * hw, Cin * p * p)


def vision_transformer_encoder(images, params, cfg):
    p = cfg["patch_size"]
    hw = cfg["image_size"] // p
    num_heads = cfg["num_heads"]

    xp = extract_patches(images, p).astype(jnp.bfloat16)           # (B, N, P)
    x = patch_embed(xp, params["patch_w"], params["patch_b"],
                    params["pos_embed"])                           # (B, N, C) bf16
    x = fused_blocks(x, params["layers"], num_heads)               # (B, N, C) f32
    B, N, C = x.shape
    # rearrange 'B (H W) C -> B C H W'
    return x.reshape(B, hw, hw, C).transpose(0, 3, 1, 2)


# ----------------------------- parameter init --------------------------------


def trunc_normal(key, shape, std=0.02):
    return std * jax.random.truncated_normal(key, -2.0, 2.0, shape, jnp.float32)


def init_params(key, cfg):
    p = cfg["patch_size"]
    Cin = cfg["input_channel"]
    C = cfg["embed_dim"]
    hw = cfg["image_size"] // p
    N = hw * hw
    P = Cin * p * p
    hidden = C * cfg["mlp_ratio"]
    depth = cfg["depth"]

    keys = iter(jax.random.split(key, 2 + 4 * depth))

    params = {
        # conv weight (C, Cin, p, p) flattened to (P, C) for x @ W ; bf16 for MXU
        "patch_w": trunc_normal(next(keys), (C, Cin, p, p))
                   .reshape(C, P).T.astype(jnp.bfloat16),
        "patch_b": jnp.zeros((1, C), jnp.float32),
        # learned positional embedding (pos_embed_type='learned')
        "pos_embed": trunc_normal(next(keys), (N, C)),
    }

    per_layer = {name: [] for name in _LAYER_ARG_ORDER}
    for _ in range(depth):
        wqkv = trunc_normal(next(keys), (3 * C, C)).T              # (C, 3C)
        per_layer["wq"].append(wqkv[:, 0:C])
        per_layer["wk"].append(wqkv[:, C:2 * C])
        per_layer["wv"].append(wqkv[:, 2 * C:3 * C])
        per_layer["bq"].append(jnp.zeros((1, C), jnp.float32))
        per_layer["bk"].append(jnp.zeros((1, C), jnp.float32))
        per_layer["bv"].append(jnp.zeros((1, C), jnp.float32))
        per_layer["wproj"].append(trunc_normal(next(keys), (C, C)).T)
        per_layer["bproj"].append(jnp.zeros((1, C), jnp.float32))
        per_layer["ln1w"].append(jnp.ones((1, C), jnp.float32))
        per_layer["ln1b"].append(jnp.zeros((1, C), jnp.float32))
        per_layer["ln2w"].append(jnp.ones((1, C), jnp.float32))
        per_layer["ln2b"].append(jnp.zeros((1, C), jnp.float32))
        per_layer["wfc1"].append(trunc_normal(next(keys), (hidden, C)).T)
        per_layer["bfc1"].append(jnp.zeros((1, hidden), jnp.float32))
        per_layer["wfc2"].append(trunc_normal(next(keys), (C, hidden)).T)
        per_layer["bfc2"].append(jnp.zeros((1, C), jnp.float32))

    stacked = {}
    for name, lst in per_layer.items():
        arr = jnp.stack(lst, axis=0)                               # (depth, ...)
        if name.startswith("w"):        # matmul weights -> bf16 (f32 accumulation)
            arr = arr.astype(jnp.bfloat16)
        stacked[name] = arr
    params["layers"] = stacked
    return params


# ----------------------------- main ------------------------------------------

if __name__ == "__main__":
    cfg = dict(
        image_size=16,
        patch_size=4,
        input_channel=4,
        embed_dim=32,
        depth=2,
        num_heads=4,
        mlp_ratio=4,
    )
    B = 2

    key = jax.random.PRNGKey(0)
    k_img, k_par = jax.random.split(key)
    images = jax.random.normal(k_img, (B, cfg["input_channel"],
                                       cfg["image_size"], cfg["image_size"]),
                               dtype=jnp.float32)
    params = init_params(k_par, cfg)

    out = vision_transformer_encoder(images, params, cfg)
    out = jax.block_until_ready(out)

    hw = cfg["image_size"] // cfg["patch_size"]
    assert out.shape == (B, cfg["embed_dim"], hw, hw), out.shape
    assert bool(jnp.all(jnp.isfinite(out)))
    print("KERNEL_OK")
</pallas_src>

<mosaic_0001>
module attributes {stable_mosaic.version = 11 : i64} {
  func.func @patch_embed_kernel(%arg0: i32, %arg1: memref<1x16x64xbf16, #tpu.memory_space<vmem>>, %arg2: memref<64x32xbf16, #tpu.memory_space<vmem>>, %arg3: memref<1x32xf32, #tpu.memory_space<vmem>>, %arg4: memref<16x32xf32, #tpu.memory_space<vmem>>, %arg5: memref<1x16x32xbf16, #tpu.memory_space<vmem>>) attributes {dimension_semantics = [#tpu.dimension_semantics<parallel>], iteration_bounds = array<i64: 2>, scalar_prefetch = 0 : i64, scratch_operands = 0 : i64, tpu.core_type = #tpu.core_type<tc>, window_params = [{transform_indices = @transform_0, window_bounds = array<i64: 1, 16, 64>}, {pipeline_mode = #tpu.pipeline_mode<synchronous>, transform_indices = @transform_1, window_bounds = array<i64: 64, 32>}, {pipeline_mode = #tpu.pipeline_mode<synchronous>, transform_indices = @transform_2, window_bounds = array<i64: 1, 32>}, {pipeline_mode = #tpu.pipeline_mode<synchronous>, transform_indices = @transform_3, window_bounds = array<i64: 16, 32>}, {transform_indices = @transform_4, window_bounds = array<i64: 1, 16, 32>}]} {
    %c0 = arith.constant 0 : index
    %c0_0 = arith.constant 0 : index
    %c0_1 = arith.constant 0 : index
    %0 = vector.load %arg1[%c0, %c0_0, %c0_1] : memref<1x16x64xbf16, #tpu.memory_space<vmem>>, vector<1x16x64xbf16>
    %1 = vector.shape_cast %0 : vector<1x16x64xbf16> to vector<16x64xbf16>
    %c0_2 = arith.constant 0 : index
    %c0_3 = arith.constant 0 : index
    %2 = vector.load %arg2[%c0_2, %c0_3] : memref<64x32xbf16, #tpu.memory_space<vmem>>, vector<64x32xbf16>
    %cst = arith.constant dense<0.000000e+00> : vector<16x32xf32>
    %3 = tpu.matmul %1, %2, %cst {dimension_numbers = #tpu.dot_dimension_numbers<[1], [0], [0], [1], [0, 0, 1, 1], [], []>} : vector<16x64xbf16>, vector<64x32xbf16>, vector<16x32xf32> -> vector<16x32xf32>
    %c0_4 = arith.constant 0 : index
    %c0_5 = arith.constant 0 : index
    %4 = vector.load %arg3[%c0_4, %c0_5] : memref<1x32xf32, #tpu.memory_space<vmem>>, vector<1x32xf32>
    %5 = vector.broadcast %4 : vector<1x32xf32> to vector<16x32xf32>
    %6 = arith.addf %3, %5 : vector<16x32xf32>
    %c0_6 = arith.constant 0 : index
    %c0_7 = arith.constant 0 : index
    %7 = vector.load %arg4[%c0_6, %c0_7] : memref<16x32xf32, #tpu.memory_space<vmem>>, vector<16x32xf32>
    %8 = arith.addf %6, %7 : vector<16x32xf32>
    %9 = arith.truncf %8 : vector<16x32xf32> to vector<16x32xbf16>
    %c0_8 = arith.constant 0 : index
    %c0_9 = arith.constant 0 : index
    %c0_10 = arith.constant 0 : index
    %10 = vector.load %arg5[%c0_8, %c0_9, %c0_10] : memref<1x16x32xbf16, #tpu.memory_space<vmem>>, vector<1x16x32xbf16>
    %11 = vector.shape_cast %10 : vector<1x16x32xbf16> to vector<16x32xbf16>
    %12 = vector.shape_cast %9 : vector<16x32xbf16> to vector<1x16x32xbf16>
    tpu.vector_store %arg5[%c0_8, %c0_9, %c0_10], %12 {strides = array<i32>} : memref<1x16x32xbf16, #tpu.memory_space<vmem>>, vector<1x16x32xbf16>,
    return
  }
  func.func @transform_0(%arg0: i32) -> (i32, i32, i32) {
    %c0_i32 = arith.constant 0 : i32
    %c0_i32_0 = arith.constant 0 : i32
    %c0_i32_1 = arith.constant 0 : i32
    return %arg0, %c0_i32, %c0_i32_0 : i32, i32, i32
  }
  func.func @transform_1(%arg0: i32) -> (i32, i32) {
    %c0_i32 = arith.constant 0 : i32
    %c0_i32_0 = arith.constant 0 : i32
    %c0_i32_1 = arith.constant 0 : i32
    return %c0_i32, %c0_i32_0 : i32, i32
  }
  func.func @transform_2(%arg0: i32) -> (i32, i32) {
    %c0_i32 = arith.constant 0 : i32
    %c0_i32_0 = arith.constant 0 : i32
    %c0_i32_1 = arith.constant 0 : i32
    return %c0_i32, %c0_i32_0 : i32, i32
  }
  func.func @transform_3(%arg0: i32) -> (i32, i32) {
    %c0_i32 = arith.constant 0 : i32
    %c0_i32_0 = arith.constant 0 : i32
    %c0_i32_1 = arith.constant 0 : i32
    return %c0_i32, %c0_i32_0 : i32, i32
  }
  func.func @transform_4(%arg0: i32) -> (i32, i32, i32) {
    %c0_i32 = arith.constant 0 : i32
    %c0_i32_0 = arith.constant 0 : i32
    %c0_i32_1 = arith.constant 0 : i32
    return %arg0, %c0_i32, %c0_i32_0 : i32, i32, i32
  }
}

</mosaic_0001>

<llo_original>
// kernel: tpu_custom_call.1
$region0: #{tpu_custom_call.1}
  #allocation0 [shape = 'u32[]', space=smem, size = 0x4, offset = 0x4, fixed_abs, tag = 'smem constant byte address 0x4 - core index']
  #allocation1 [shape = 'u32[144,128]{1,0:T(1,128)}', space=vmem, size = 0x12000, scoped, tag = 'internal scratch']
  %s0 = inlined_call_operand.vmem [shape: bf16[2,16,64], index: 0, kind: input, shape index: {}]
  %s1 = inlined_call_operand.vmem [shape: bf16[64,32], index: 1, kind: input, shape index: {}]
  %s2 = inlined_call_operand.vmem [shape: f32[1,32], index: 2, kind: input, shape index: {}]
  %s3 = inlined_call_operand.vmem [shape: f32[16,32], index: 3, kind: input, shape index: {}]
  %s4 = inlined_call_operand.hbm [shape: bf16[2,16,32], index: 4, kind: output, shape index: {}]
  %s5 = sld [smem:[#allocation0]]
  $region49: #{tpu_custom_call.1} parent=0
    _
  %s7 = ssub.s32 1, %s5
  %s8 = scalar_select 0, %s7, %s5
  $region1: #{tpu_custom_call.1} parent=0
    #allocation2 [shape = 'u8[8192]{0}', space=vmem, size = 0x2000, scoped, tag = 'output window, operand 0']
    #allocation3 [shape = 's32[2]{0}', space=sflag, size = 0x8, scoped, tag = 'scoped memory for tpu_custom_call.1']
    %9 = vsyncpa [#allocation3], 0
    %s10 = scalar_lea.sflag [#allocation3], 1
    %11 = vsyncpa %s10, 0
    loop: start=0, step=1, limit=4
    $region2: #{tpu_custom_call.1} parent=1 // loop_pre_header
      _
    $region3: #{tpu_custom_call.1} parent=1 // loop_header
      %s13 = sphi 0, %s17
      %p14 = scmp.ge.s32.totalorder %s13, 4
      %s23 = sphi 0, %s25
      %s26 = sphi 0, %s23
      %s27 = sphi 0, %s26
      %s43 = sphi 0, %s27
      %s47 = sphi 0, %s47
      %s49 = sphi 0, %s47
      %s50 = sphi 0, %s49
      %s64 = sphi 0, %s50
      %s68 = sphi 0, %s68
      %s70 = sphi 0, %s68
      %s71 = sphi 0, %s70
      %s85 = sphi 0, %s71
      %s89 = sphi 0, %s89
      %s91 = sphi 0, %s89
      %s92 = sphi 0, %s91
      %s106 = sphi 0, %s92
      %s112 = sphi 0, %s114
      %s115 = sphi 0, %s112
      %s116 = sphi 0, %s115
      %s132 = sphi 0, %s116
    $region4: #{tpu_custom_call.1} parent=1 // loop_header_branch
      %16 = sbr.rel (%p14) target = $region8
    $region5: #{tpu_custom_call.1} parent=1 // loop_body
      %s18 = ssub.s32 %s13, 1
      %s19 = ssub.s32 %s13, 2
      %s20 = sadd.s32 %s13, 1
      %s21 = ssub.s32 %s13, %s20
      %p22 = scmp.eq.s32.totalorder %s21, 0
      %s24 = sadd.s32 %s23, 1
      %s25 = scalar_select %p22, %s23, %s24
      %p28 = pneg %p22
      %p29 = scmp.eq.s32.totalorder %s13, 1
      %p30 = por %p28, %p29
      %p31 = scmp.ne.s32.totalorder %s23, %s26
      %p32 = scmp.eq.s32.totalorder %s13, 0
      %p33 = por %p31, %p32
      %p34 = scmp.ne.s32.totalorder %s23, %s26
      %p35 = scmp.eq.s32.totalorder %s18, 1
      %p36 = por %p34, %p35
      %p37 = scmp.ne.s32.totalorder %s26, %s27
      %p38 = scmp.eq.s32.totalorder %s18, 0
      %p39 = por %p37, %p38
      %p40 = scmp.ne.s32.totalorder %s26, %s27
      %p41 = scmp.eq.s32.totalorder %s19, 1
      %p42 = por %p40, %p41
      %p44 = scmp.ne.s32.totalorder %s27, %s43
      %p45 = scmp.eq.s32.totalorder %s19, 0
      %p46 = por %p44, %p45
      %s48 = sadd.s32 %s47, 1
      %p51 = scmp.eq.s32.totalorder %s13, 1
      %p52 = scmp.ne.s32.totalorder %s47, %s49
      %p53 = scmp.eq.s32.totalorder %s13, 0
      %p54 = por %p52, %p53
      %p55 = scmp.ne.s32.totalorder %s47, %s49
      %p56 = scmp.eq.s32.totalorder %s18, 1
      %p57 = por %p55, %p56
      %p58 = scmp.ne.s32.totalorder %s49, %s50
      %p59 = scmp.eq.s32.totalorder %s18, 0
      %p60 = por %p58, %p59
      %p61 = scmp.ne.s32.totalorder %s49, %s50
      %p62 = scmp.eq.s32.totalorder %s19, 1
      %p63 = por %p61, %p62
      %p65 = scmp.ne.s32.totalorder %s50, %s64
      %p66 = scmp.eq.s32.totalorder %s19, 0
      %p67 = por %p65, %p66
      %s69 = sadd.s32 %s68, 1
      %p72 = scmp.eq.s32.totalorder %s13, 1
      %p73 = scmp.ne.s32.totalorder %s68, %s70
      %p74 = scmp.eq.s32.totalorder %s13, 0
      %p75 = por %p73, %p74
      %p76 = scmp.ne.s32.totalorder %s68, %s70
      %p77 = scmp.eq.s32.totalorder %s18, 1
      %p78 = por %p76, %p77
      %p79 = scmp.ne.s32.totalorder %s70, %s71
      %p80 = scmp.eq.s32.totalorder %s18, 0
      %p81 = por %p79, %p80
      %p82 = scmp.ne.s32.totalorder %s70, %s71
      %p83 = scmp.eq.s32.totalorder %s19, 1
      %p84 = por %p82, %p83
      %p86 = scmp.ne.s32.totalorder %s71, %s85
      %p87 = scmp.eq.s32.totalorder %s19, 0
      %p88 = por %p86, %p87
      %s90 = sadd.s32 %s89, 1
      %p93 = scmp.eq.s32.totalorder %s13, 1
      %p94 = scmp.ne.s32.totalorder %s89, %s91
      %p95 = scmp.eq.s32.totalorder %s13, 0
      %p96 = por %p94, %p95
      %p97 = scmp.ne.s32.totalorder %s89, %s91
      %p98 = scmp.eq.s32.totalorder %s18, 1
      %p99 = por %p97, %p98
      %p100 = scmp.ne.s32.totalorder %s91, %s92
      %p101 = scmp.eq.s32.totalorder %s18, 0
      %p102 = por %p100, %p101
      %p103 = scmp.ne.s32.totalorder %s91, %s92
      %p104 = scmp.eq.s32.totalorder %s19, 1
      %p105 = por %p103, %p104
      %p107 = scmp.ne.s32.totalorder %s92, %s106
      %p108 = scmp.eq.s32.totalorder %s19, 0
      %p109 = por %p107, %p108
      %s110 = ssub.s32 %s13, %s20
      %p111 = scmp.eq.s32.totalorder %s110, 0
      %s113 = sadd.s32 %s112, 1
      %s114 = scalar_select %p111, %s112, %s113
      %p117 = pneg %p111
      %p118 = scmp.eq.s32.totalorder %s13, 1
      %p119 = por %p117, %p118
      %p120 = scmp.ne.s32.totalorder %s112, %s115
      %p121 = scmp.eq.s32.totalorder %s13, 0
      %p122 = por %p120, %p121
      %p123 = scmp.ne.s32.totalorder %s112, %s115
      %p124 = scmp.eq.s32.totalorder %s18, 1
      %p125 = por %p123, %p124
      %p126 = scmp.ne.s32.totalorder %s115, %s116
      %p127 = scmp.eq.s32.totalorder %s18, 0
      %p128 = por %p126, %p127
      %p129 = scmp.ne.s32.totalorder %s115, %s116
      %p130 = scmp.eq.s32.totalorder %s19, 1
      %p131 = por %p129, %p130
      %p133 = scmp.ne.s32.totalorder %s116, %s132
      %p134 = scmp.eq.s32.totalorder %s19, 0
      %p135 = por %p133, %p134
      %p136 = scmp.le.s32.totalorder 1, %s13
      %p137 = scmp.lt.s32.totalorder %s13, 3
      %p138 = pnand %p136, %p137
      %p139 = pneg %p138
      // Predicated region
      $region9: #{tpu_custom_call.1} parent=5 // pred_check
        _
      $region10: #{tpu_custom_call.1} parent=5 // pred_check_branch
        %141 = sbr.rel (%p138) target = $region12
      $region11: #{tpu_custom_call.1} parent=5 // pred_region
        %s142 = ssub.s32 %s13, 1
        // Predicated region
        $region13: #{tpu_custom_call.1} parent=11 // pred_check
          %p143 = pneg %p60
        $region14: #{tpu_custom_call.1} parent=11 // pred_check_branch
          %145 = sbr.rel (%p143) target = $region16
        $region15: #{tpu_custom_call.1} parent=11 // pred_region
          _
        $region16: #{tpu_custom_call.1} parent=11 // pred_fallthru
          _
        // Predicated region
        $region17: #{tpu_custom_call.1} parent=11 // pred_check
          %p146 = pneg %p81
        $region18: #{tpu_custom_call.1} parent=11 // pred_check_branch
          %148 = sbr.rel (%p146) target = $region20
        $region19: #{tpu_custom_call.1} parent=11 // pred_region
          _
        $region20: #{tpu_custom_call.1} parent=11 // pred_fallthru
          _
        // Predicated region
        $region21: #{tpu_custom_call.1} parent=11 // pred_check
          %p149 = pneg %p102
        $region22: #{tpu_custom_call.1} parent=11 // pred_check_branch
          %151 = sbr.rel (%p149) target = $region24
        $region23: #{tpu_custom_call.1} parent=11 // pred_region
          _
        $region24: #{tpu_custom_call.1} parent=11 // pred_fallthru
          _
      $region12: #{tpu_custom_call.1} parent=5 // pred_fallthru
        _
      %p152 = scmp.lt.s32.totalorder %s13, 2
      // Predicated region
      $region25: #{tpu_custom_call.1} parent=5 // pred_check
        %p153 = pneg %p152
      $region26: #{tpu_custom_call.1} parent=5 // pred_check_branch
        %155 = sbr.rel (%p153) target = $region28
      $region27: #{tpu_custom_call.1} parent=5 // pred_region
        // Predicated region
        $region29: #{tpu_custom_call.1} parent=27 // pred_check
          %p156 = pneg %p33
        $region30: #{tpu_custom_call.1} parent=27 // pred_check_branch
          %158 = sbr.rel (%p156) target = $region32
        $region31: #{tpu_custom_call.1} parent=27 // pred_region
          %p159 = scmp.lt.s32.totalorder %s13, 1
          %s160 = scalar_select %p159, %s13, 1
          %s161 = smul.addr %s160, 2
          %s162 = smul.addr %s161, 4
          %s163 = scalar_lea.vmem %s0, %s162
        $region32: #{tpu_custom_call.1} parent=27 // pred_fallthru
          _
      $region28: #{tpu_custom_call.1} parent=5 // pred_fallthru
        _
      %p164 = scmp.le.s32.totalorder 1, %s13
      %p165 = scmp.lt.s32.totalorder %s13, 3
      %p166 = pnand %p164, %p165
      %p167 = pneg %p166
      // Predicated region
      $region33: #{tpu_custom_call.1} parent=5 // pred_check
        _
      $region34: #{tpu_custom_call.1} parent=5 // pred_check_branch
        %169 = sbr.rel (%p166) target = $region36
      $region35: #{tpu_custom_call.1} parent=5 // pred_region
        %s170 = ssub.s32 %s13, 1
        %p171 = scmp.lt.s32.totalorder %s18, 1
        %s172 = scalar_select %p171, %s18, 1
        %s173 = smul.addr %s172, 2
        %s174 = smul.addr %s173, 4
        %s175 = scalar_lea.vmem %s0, %s174
        %p176 = pneg %p39
        %p177 = pneg %p36
        %p178 = pneg %p60
        %p179 = pneg %p57
        %p180 = pneg %p81
        %p181 = pneg %p78
        %p182 = pneg %p102
        %p183 = pneg %p99
        %p184 = pneg %p128
        %p185 = pneg %p125
        %s186 = sand.u32 %s115, 1
        %s187 = scalar_lea.sflag [#allocation3], %s186
        %s188 = sand.u32 %s115, 1
        %s189 = smul.addr %s188, 8
        %s190 = scalar_lea.vmem [#allocation2], %s189
        %p191 = scmp.lt.s32.totalorder %s18, 1
        %s192 = scalar_select %p191, %s18, 1
        %s193 = smul.addr %s192, 2
        %s194 = smul.addr %s193, 4
        %s195 = scalar_lea.vmem %s0, %s194
        %v197 = vld [vmem:[%s195] sm:$0xf]
        %v198 = vld [vmem:[%s195 + $0x4] sm:$0xf]
        %v199 = vld [vmem:[%s1] sm:$0xf]
        %v200 = vld [vmem:[%s1 + $0x4] sm:$0xf]
        %v201 = vld [vmem:[%s1 + $0x8] sm:$0xf]
        %v202 = vld [vmem:[%s1 + $0xc] sm:$0xf]
        %v203 = vld [vmem:[%s1 + $0x10] sm:$0xf]
        %v204 = vld [vmem:[%s1 + $0x14] sm:$0xf]
        %v205 = vld [vmem:[%s1 + $0x18] sm:$0xf]
        %v206 = vld [vmem:[%s1 + $0x1c] sm:$0xf]
        %v207 = vld [vmem:[%s2] sm:$0x1]
        %v209 = vlaneseq
        %v210 = vshrl.u32 %v209, 7
        %v211 = vsub.s32 0, %v210
        %v212 = vrot.slane %v207, %v211
        %v216 = vunpack.c.l.b16 %v197
        %v217 = vunpack.c.l.b16 %v198
        %v218 = vpack.c.b16 %v217, %v216
        %v227 = vunpack.c.l.b16 %v199
        %v228 = vunpack.c.l.b16 %v200
        %v229 = vunpack.c.l.b16 %v201
        %v230 = vunpack.c.l.b16 %v202
        %v231 = vunpack.c.l.b16 %v203
        %v232 = vunpack.c.l.b16 %v204
        %v233 = vunpack.c.l.b16 %v205
        %v234 = vunpack.c.l.b16 %v206
        %v235 = vpack.c.b16 %v228, %v227
        %v236 = vpack.c.b16 %v230, %v229
        %v237 = vpack.c.b16 %v232, %v231
        %v238 = vpack.c.b16 %v234, %v233
        %vm243 = vcmask 523264
        %v245 = vsel %vm243, %v218, 0
        %247 = vmatprep.subr.bf16.mxu0 0
        %248 = vmatpush1.bf16.msra.mxu0 %v235
        %249 = vmatprep.subr.bf16.mxu0 0
        %250 = vmatpush1.bf16.msra.mxu0 %v236
        %251 = vmatprep.subr.bf16.mxu0 0
        %252 = vmatpush1.bf16.msra.mxu0 %v237
        %253 = vmatprep.subr.bf16.mxu0 0
        %254 = vmatpush1.bf16.msra.mxu0 %v238
        %255 = vmatprep.subr.bf16.mxu0 0
        %256 = vmatpush1.bf16.msra.mxu0 0
        %257 = vmatprep.subr.bf16.mxu0 0
        %258 = vmatpush1.bf16.msra.mxu0 0
        %259 = vmatprep.subr.bf16.mxu0 0
        %260 = vmatpush1.bf16.msra.mxu0 0
        %261 = vmatprep.subr.bf16.mxu0 0
        %262 = vmatpush1.bf16.msra.mxu0 0
        %263 = vmatprep.subr.bf16.mxu0 0
        %264 = vmatpush1.bf16.msra.mxu0 0
        %265 = vmatprep.subr.bf16.mxu0 0
        %266 = vmatpush1.bf16.msra.mxu0 0
        %267 = vmatprep.subr.bf16.mxu0 0
        %268 = vmatpush1.bf16.msra.mxu0 0
        %269 = vmatprep.subr.bf16.mxu0 0
        %270 = vmatpush1.bf16.msra.mxu0 0
        %271 = vmatprep.subr.bf16.mxu0 0
        %272 = vmatpush1.bf16.msra.mxu0 0
        %273 = vmatprep.subr.bf16.mxu0 0
        %274 = vmatpush1.bf16.msra.mxu0 0
        %275 = vmatprep.subr.bf16.mxu0 0
        %276 = vmatpush1.bf16.msra.mxu0 0
        %277 = vmatprep.subr.bf16.mxu0 0
        %278 = vmatpush1.bf16.msra.mxu0 0
        %279 = vmatprep.mubr.bf16.mxu0 0
        %280 = vmatmul.mubr.bf16.gmra.mrb[0].mxu0 %v245
        %v281 = vpop.f32.mrb[0].mxu0
        %v282 = vadd.f32 %v212, %v281
        %v283 = vpop.f32.mrb[0].mxu0
        %v284 = vpop.f32.mrb[0].mxu0
        %v285 = vadd.f32 %v212, %v284
        %v286 = vpop.f32.mrb[0].mxu0
        %287 = vdwg.mxu0
        %v288 = vld [vmem:[%s3] sm:$0xff]
        %v289 = vld [vmem:[%s3 + $0x8] sm:$0xff]
        %v290 = vadd.f32 %v282, %v288
        %v291 = vadd.f32 %v285, %v289
        %v292 = vpack.c.bf16 %v291, %v290
        %v294 = vunpack.c.l.b16 %v292
        %v295 = vunpack.c.h.b16 %v292
        %v296 = vpack.c.b16 %v294, %v294
        %v297 = vpack.c.b16 %v295, %v295
        %vm300 = vcmask 257024
        %301 = vst.msk [vmem:[%s190] sm:$0xf] %vm300, %v296
        %302 = vst.msk [vmem:[%s190 + $0x4] sm:$0xf] %vm300, %v297
        %s303 = sand.u32 %s115, 1
        %s304 = scalar_lea.sflag [#allocation3], %s303
        %s305 = sand.u32 %s115, 1
        %s306 = smul.addr %s305, 8
        %s307 = scalar_lea.vmem [#allocation2], %s306
        // Predicated region
        $region37: #{tpu_custom_call.1} parent=35 // pred_check
          %p308 = pneg %p125
        $region38: #{tpu_custom_call.1} parent=35 // pred_check_branch
          %310 = sbr.rel (%p308) target = $region40
        $region39: #{tpu_custom_call.1} parent=35 // pred_region
          %s312 = ssub.s32 128, 128
          %313 = vsyncadd %s304, %s312
          %s314 = smul.addr %s18, 2
          %s315 = smul.addr %s314, 64
          %s316 = scalar_lea.hbm %s4, %s315
          %s317 = sshll.u32 %s307, 4
          %s318 = int_to_ptr.vmem [resolvable:$true] %s317
          %323 = dma.vmem_to_hbm [thread:$0]  %s318, 128, %s316, %s304, 64, 64, 4
        $region40: #{tpu_custom_call.1} parent=35 // pred_fallthru
          _
      $region36: #{tpu_custom_call.1} parent=5 // pred_fallthru
        _
      %p324 = scmp.le.s32.totalorder 2, %s13
      // Predicated region
      $region41: #{tpu_custom_call.1} parent=5 // pred_check
        %p325 = pneg %p324
      $region42: #{tpu_custom_call.1} parent=5 // pred_check_branch
        %327 = sbr.rel (%p325) target = $region44
      $region43: #{tpu_custom_call.1} parent=5 // pred_region
        %s328 = ssub.s32 %s13, 2
        // Predicated region
        $region45: #{tpu_custom_call.1} parent=43 // pred_check
          %p329 = pneg %p131
        $region46: #{tpu_custom_call.1} parent=43 // pred_check_branch
          %331 = sbr.rel (%p329) target = $region48
        $region47: #{tpu_custom_call.1} parent=43 // pred_region
          %s332 = sand.u32 %s116, 1
          %s333 = scalar_lea.sflag [#allocation3], %s332
          %s334 = sand.u32 %s116, 1
          %s335 = smul.addr %s334, 8
          %s336 = scalar_lea.vmem [#allocation2], %s335
          %337 = dma.done %s333, 128
        $region48: #{tpu_custom_call.1} parent=43 // pred_fallthru
          _
      $region44: #{tpu_custom_call.1} parent=5 // pred_fallthru
        _
    $region6: #{tpu_custom_call.1} parent=1 // loop_footer
      %s17 = sadd.s32 1, %s13
    $region7: #{tpu_custom_call.1} parent=1 // loop_footer_branch
      %12 = sbr.rel target = $region3
    $region8: #{tpu_custom_call.1} parent=1 // loop_exit
      _
    %338 = vsyncpa [#allocation3], 1
    %s339 = scalar_lea.sflag [#allocation3], 1
    %340 = vsyncpa %s339, 1

</llo_original>
